<compile_context>
chip_gen: v6e
topology: v6e:2x2x1
jax: 0.10.0
libtpu: 0.0.40
codegen_flags: <defaults>
</compile_context>

<pallas_src>
import functools

import jax
import jax.numpy as jnp
from jax.experimental import pallas as pl
from jax.experimental.pallas import tpu as pltpu

EPS = 1e-5
LANE = 128
VMEM_BUDGET_BYTES = 24 * 1024 * 1024  # conservative vs v7x 32 MiB scoped default


def _round_up(n, m):
    return (n + m - 1) // m * m


def _pick_feature_tile(f_pad, batch, state_size):
    """Largest multiple-of-128 feature tile (<= 512 lanes) that divides F_PAD,
    fits the VMEM budget, and leaves >= 2 grid steps when F_PAD >= 256 so the
    feature axis can shard across both v7x TensorCores."""
    n = f_pad // LANE

    def vmem_bytes(tile_f):
        # resident x block + (up to triple-buffered) weight tile
        # + double-buffered params + double-buffered output tile, all f32.
        return 4 * (
            batch * state_size
            + 3 * state_size * tile_f
            + 2 * 4 * tile_f
            + 2 * batch * tile_f
        )

    best = LANE
    for d in range(min(n, 4), 0, -1):  # tile_f in {512, 384, 256, 128}
        if n % d != 0:
            continue
        if n // d < 2 and n >= 2:
            continue  # prefer >= 2 feature tiles (v7x dual-TC) when possible
        if vmem_bytes(d * LANE) > VMEM_BUDGET_BYTES:
            continue
        best = d * LANE
        break
    return best


def base_network_kernel(x_ref, w_ref, params_ref, o_ref):
    # x: (B, S)   w: (S, TF)   params: (4, TF) rows = [bias, gamma, beta, spare]
    # o: (B, TF_OUT) with TF_OUT == TF (lane-dense path) or TF_OUT < TF
    # (small padded path: static slice before the single masked store).
    x = x_ref[...]
    w = w_ref[...]
    b = params_ref[0:1, :]
    gamma = params_ref[1:2, :]
    beta = params_ref[2:3, :]

    # Linear + ReLU: MXU matmul with f32 accumulation. x/w may be bf16 on
    # v6e/v7x (caller-controlled via pack_params); epilogue stays f32.
    h = jnp.dot(x, w, preferred_element_type=jnp.float32) + b
    p = jnp.maximum(h, 0.0)

    # BatchNorm1d (training mode): per-feature batch statistics, biased
    # variance. Single-pass stats keep the two cross-sublane XLU reductions
    # back-to-back instead of serializing behind a full-tile subtraction.
    inv_n = 1.0 / p.shape[0]  # static python float
    s1 = jnp.sum(p, axis=0, keepdims=True)
    s2 = jnp.sum(p * p, axis=0, keepdims=True)
    mean = s1 * inv_n
    var = jnp.maximum(s2 * inv_n - mean * mean, 0.0)  # clamp cancellation
    inv_std = jax.lax.rsqrt(var + EPS)

    # Folded epilogue: only two full (B, TF) VPU ops (mul + add); the
    # gamma/beta/mean arithmetic stays on (1, TF) row vectors.
    scale = inv_std * gamma
    shift = beta - mean * scale
    out = p * scale + shift

    # Static slice: a no-op when o_ref is full tile width (unmasked lane-dense
    # vst); otherwise one masked vst — replaces the old post-kernel XLA slice.
    o_ref[...] = out[:, : o_ref.shape[1]].astype(o_ref.dtype)


@functools.partial(jax.jit, static_argnames=("fc1_units",))
def base_network_forward(x, w_pad, params_pad, *, fc1_units):
    """x: (B, S); w_pad: (S, F_PAD) (f32 or bf16); params_pad: (4, F_PAD) f32.
    Returns (B, fc1_units) f32 — no post-kernel slicing."""
    batch, state_size = x.shape
    f_pad = w_pad.shape[1]
    x = x.astype(w_pad.dtype)  # keep matmul operands in the same (MXU) dtype

    if fc1_units % LANE == 0:
        # Lane-dense path: tile the feature axis (BN stats are per-feature, so
        # tiles are fully independent); all stores are unmasked.
        tile_f = _pick_feature_tile(f_pad, batch, state_size)
        num_tiles = pl.cdiv(f_pad, tile_f)
        out_tile = tile_f
    else:
        # Small padded path (e.g. fc1_units=64): single step, compute on the
        # padded width, store only the real columns.
        tile_f = f_pad
        num_tiles = 1
        out_tile = fc1_units  # equals the full output dims -> legal block

    if num_tiles >= 3:
        # Scale-up insurance: deeper buffering on the only per-step DMA (the
        # weight tile). x and params stay resident (constant index_map).
        w_spec = pl.BlockSpec(
            (state_size, tile_f), lambda j: (0, j), pipeline_mode=pl.Buffered(3)
        )
    else:
        w_spec = pl.BlockSpec((state_size, tile_f), lambda j: (0, j))

    return pl.pallas_call(
        base_network_kernel,
        out_shape=jax.ShapeDtypeStruct((batch, fc1_units), jnp.float32),
        grid_spec=pltpu.PrefetchScalarGridSpec(
            num_scalar_prefetch=0,
            grid=(num_tiles,),
            in_specs=[
                pl.BlockSpec((batch, state_size), lambda j: (0, 0)),
                w_spec,
                pl.BlockSpec((4, tile_f), lambda j: (0, j)),
            ],
            out_specs=pl.BlockSpec((batch, out_tile), lambda j: (0, j)),
        ),
        compiler_params=pltpu.CompilerParams(
            dimension_semantics=("parallel",),
        ),
    )(x, w_pad, params_pad)


def init_params(key, state_size, fc1_units):
    """Deterministic init mirroring nn.Linear's default (uniform +/- 1/sqrt(fan_in))
    and BatchNorm1d's default (gamma=1, beta=0)."""
    k_w, k_b = jax.random.split(key)
    bound = 1.0 / jnp.sqrt(jnp.float32(state_size))
    # Stored as (state_size, fc1_units) == transpose of PyTorch's weight.
    w = jax.random.uniform(
        k_w, (state_size, fc1_units), jnp.float32, minval=-bound, maxval=bound
    )
    b = jax.random.uniform(
        k_b, (1, fc1_units), jnp.float32, minval=-bound, maxval=bound
    )
    gamma = jnp.ones((1, fc1_units), jnp.float32)
    beta = jnp.zeros((1, fc1_units), jnp.float32)
    return w, b, gamma, beta


def pack_params(w, b, gamma, beta, mxu_dtype=jnp.float32):
    """Zero-pad the feature axis to a multiple of 128 and pack bias/gamma/beta
    (+1 spare row) into a single (4, F_PAD) array. Set mxu_dtype=jnp.bfloat16
    on v6e/v7x when the layer is scaled up (halves weight DMA, MXU-native)."""
    _, fc1_units = w.shape
    f_pad = max(_round_up(fc1_units, LANE), LANE)
    pad = f_pad - fc1_units
    w_pad = jnp.pad(w.astype(mxu_dtype), ((0, 0), (0, pad)))
    params = jnp.concatenate(
        [b, gamma, beta, jnp.zeros((1, fc1_units), jnp.float32)], axis=0
    )
    params_pad = jnp.pad(params, ((0, 0), (0, pad)))
    return w_pad, params_pad


def reference_forward(x, w, b, gamma, beta):
    """Pure-JAX reference of BaseNetwork.forward (training-mode BatchNorm1d)."""
    p = jnp.maximum(x @ w + b, 0.0)
    mean = jnp.mean(p, axis=0, keepdims=True)
    var = jnp.mean((p - mean) ** 2, axis=0, keepdims=True)
    return (p - mean) / jnp.sqrt(var + EPS) * gamma + beta


if __name__ == "__main__":
    # TODO(synk): at B=8 this layer is dispatch/latency bound; real callers
    # should stack many states per call (B >= 128-256) and/or fuse the next
    # layers into this kernel body so the BN output never returns to HBM.
    key = jax.random.PRNGKey(0)
    k_p1, k_x1, k_p2, k_x2 = jax.random.split(key, 4)

    # Case 1: the module's small config (padded path, single masked store,
    # no post-kernel slice).
    state_size, fc1_units, batch = 32, 64, 8
    w, b, gamma, beta = init_params(k_p1, state_size, fc1_units)
    w_pad, params_pad = pack_params(w, b, gamma, beta)
    x = jax.random.normal(k_x1, (batch, state_size), jnp.float32)
    out = jax.block_until_ready(
        base_network_forward(x, w_pad, params_pad, fc1_units=fc1_units)
    )
    ref = reference_forward(x, w, b, gamma, beta)
    assert out.shape == (batch, fc1_units)
    assert jnp.allclose(out, ref, atol=1e-4, rtol=1e-3), "mismatch (padded path)"

    # Case 2: lane-dense multi-tile path (fc1_units % 128 == 0 -> 2 feature
    # tiles, unmasked stores; grid sharding across both TCs on v7x).
    state2, fc2, batch2 = 32, 256, 8
    w2, b2, g2, be2 = init_params(k_p2, state2, fc2)
    w2_pad, p2_pad = pack_params(w2, b2, g2, be2)
    x2 = jax.random.normal(k_x2, (batch2, state2), jnp.float32)
    out2 = jax.block_until_ready(
        base_network_forward(x2, w2_pad, p2_pad, fc1_units=fc2)
    )
    ref2 = reference_forward(x2, w2, b2, g2, be2)
    assert out2.shape == (batch2, fc2)
    assert jnp.allclose(out2, ref2, atol=1e-4, rtol=1e-3), "mismatch (tiled path)"

    print("KERNEL_OK")
</pallas_src>

<mosaic_0001>
module attributes {stable_mosaic.version = 11 : i64} {
  func.func @base_network_kernel(%arg0: i32, %arg1: memref<8x32xf32, #tpu.memory_space<vmem>>, %arg2: memref<32x128xf32, #tpu.memory_space<vmem>>, %arg3: memref<4x128xf32, #tpu.memory_space<vmem>>, %arg4: memref<8x64xf32, #tpu.memory_space<vmem>>) attributes {dimension_semantics = [#tpu.dimension_semantics<parallel>], iteration_bounds = array<i64: 1>, scalar_prefetch = 0 : i64, scratch_operands = 0 : i64, tpu.core_type = #tpu.core_type<tc>, window_params = [{pipeline_mode = #tpu.pipeline_mode<synchronous>, transform_indices = @transform_0, window_bounds = array<i64: 8, 32>}, {transform_indices = @transform_1, window_bounds = array<i64: 32, 128>}, {transform_indices = @transform_2, window_bounds = array<i64: 4, 128>}, {transform_indices = @transform_3, window_bounds = array<i64: 8, 64>}]} {
    %c0 = arith.constant 0 : index
    %c0_0 = arith.constant 0 : index
    %0 = vector.load %arg1[%c0, %c0_0] : memref<8x32xf32, #tpu.memory_space<vmem>>, vector<8x32xf32>
    %c0_1 = arith.constant 0 : index
    %c0_2 = arith.constant 0 : index
    %1 = vector.load %arg2[%c0_1, %c0_2] : memref<32x128xf32, #tpu.memory_space<vmem>>, vector<32x128xf32>
    %c0_3 = arith.constant 0 : index
    %c0_4 = arith.constant 0 : index
    %2 = vector.load %arg3[%c0_3, %c0_4] : memref<4x128xf32, #tpu.memory_space<vmem>>, vector<1x128xf32>
    %c1 = arith.constant 1 : index
    %c0_5 = arith.constant 0 : index
    %3 = vector.load %arg3[%c1, %c0_5] : memref<4x128xf32, #tpu.memory_space<vmem>>, vector<1x128xf32>
    %c2 = arith.constant 2 : index
    %c0_6 = arith.constant 0 : index
    %4 = vector.load %arg3[%c2, %c0_6] : memref<4x128xf32, #tpu.memory_space<vmem>>, vector<1x128xf32>
    %cst = arith.constant dense<0.000000e+00> : vector<8x128xf32>
    %5 = tpu.matmul %0, %1, %cst {dimension_numbers = #tpu.dot_dimension_numbers<[1], [0], [0], [1], [0, 0, 1, 1], [], []>} : vector<8x32xf32>, vector<32x128xf32>, vector<8x128xf32> -> vector<8x128xf32>
    %6 = vector.broadcast %2 : vector<1x128xf32> to vector<8x128xf32>
    %7 = arith.addf %5, %6 : vector<8x128xf32>
    %cst_7 = arith.constant 0.000000e+00 : f32
    %8 = vector.broadcast %cst_7 : f32 to vector<8x128xf32>
    %9 = arith.maximumf %7, %8 : vector<8x128xf32>
    %cst_8 = arith.constant dense<0.000000e+00> : vector<128xf32>
    %10 = vector.multi_reduction <add>, %9, %cst_8 [0] : vector<8x128xf32> to vector<128xf32>
    %11 = vector.shape_cast %10 : vector<128xf32> to vector<1x128xf32>
    %12 = arith.mulf %9, %9 : vector<8x128xf32>
    %cst_9 = arith.constant dense<0.000000e+00> : vector<128xf32>
    %13 = vector.multi_reduction <add>, %12, %cst_9 [0] : vector<8x128xf32> to vector<128xf32>
    %14 = vector.shape_cast %13 : vector<128xf32> to vector<1x128xf32>
    %cst_10 = arith.constant 1.250000e-01 : f32
    %15 = vector.broadcast %cst_10 : f32 to vector<1x128xf32>
    %16 = arith.mulf %11, %15 : vector<1x128xf32>
    %cst_11 = arith.constant 1.250000e-01 : f32
    %17 = vector.broadcast %cst_11 : f32 to vector<1x128xf32>
    %18 = arith.mulf %14, %17 : vector<1x128xf32>
    %19 = arith.mulf %16, %16 : vector<1x128xf32>
    %20 = arith.subf %18, %19 : vector<1x128xf32>
    %cst_12 = arith.constant 0.000000e+00 : f32
    %21 = vector.broadcast %cst_12 : f32 to vector<1x128xf32>
    %22 = arith.maximumf %20, %21 : vector<1x128xf32>
    %cst_13 = arith.constant 9.99999974E-6 : f32
    %23 = vector.broadcast %cst_13 : f32 to vector<1x128xf32>
    %24 = arith.addf %22, %23 : vector<1x128xf32>
    %25 = math.rsqrt %24 : vector<1x128xf32>
    %26 = arith.mulf %25, %3 : vector<1x128xf32>
    %27 = arith.mulf %16, %26 : vector<1x128xf32>
    %28 = arith.subf %4, %27 : vector<1x128xf32>
    %29 = vector.broadcast %26 : vector<1x128xf32> to vector<8x128xf32>
    %30 = arith.mulf %9, %29 : vector<8x128xf32>
    %31 = vector.broadcast %28 : vector<1x128xf32> to vector<8x128xf32>
    %32 = arith.addf %30, %31 : vector<8x128xf32>
    %33 = vector.extract_strided_slice %32 {offsets = [0, 0], sizes = [8, 64], strides = [1, 1]} : vector<8x128xf32> to vector<8x64xf32>
    %c0_14 = arith.constant 0 : index
    %c0_15 = arith.constant 0 : index
    %34 = vector.load %arg4[%c0_14, %c0_15] : memref<8x64xf32, #tpu.memory_space<vmem>>, vector<8x64xf32>
    tpu.vector_store %arg4[%c0_14, %c0_15], %33 {strides = array<i32>} : memref<8x64xf32, #tpu.memory_space<vmem>>, vector<8x64xf32>,
    return
  }
  func.func @transform_0(%arg0: i32) -> (i32, i32) {
    %c0_i32 = arith.constant 0 : i32
    %c0_i32_0 = arith.constant 0 : i32
    %c0_i32_1 = arith.constant 0 : i32
    return %c0_i32, %c0_i32_0 : i32, i32
  }
  func.func @transform_1(%arg0: i32) -> (i32, i32) {
    %c0_i32 = arith.constant 0 : i32
    %c0_i32_0 = arith.constant 0 : i32
    return %c0_i32, %arg0 : i32, i32
  }
  func.func @transform_2(%arg0: i32) -> (i32, i32) {
    %c0_i32 = arith.constant 0 : i32
    %c0_i32_0 = arith.constant 0 : i32
    return %c0_i32, %arg0 : i32, i32
  }
  func.func @transform_3(%arg0: i32) -> (i32, i32) {
    %c0_i32 = arith.constant 0 : i32
    %c0_i32_0 = arith.constant 0 : i32
    return %c0_i32, %arg0 : i32, i32
  }
}

</mosaic_0001>

<llo_original>
// kernel: base_network_forward.1
$region0: #{base_network_forward.1}
  #allocation0 [shape = 'u32[]', space=smem, size = 0x4, offset = 0x4, fixed_abs, tag = 'smem constant byte address 0x4 - core index']
  #allocation1 [shape = 'u32[144,128]{1,0:T(1,128)}', space=vmem, size = 0x12000, scoped, tag = 'internal scratch']
  %s0 = inlined_call_operand.hbm [shape: f32[8,32], index: 0, kind: input, shape index: {}]
  %s1 = inlined_call_operand.hbm [shape: f32[32,128], index: 1, kind: input, shape index: {}]
  %s2 = inlined_call_operand.hbm [shape: f32[4,128], index: 2, kind: input, shape index: {}]
  %s3 = inlined_call_operand.hbm [shape: f32[8,64], index: 3, kind: output, shape index: {}]
  %s4 = sld [smem:[#allocation0]]
  $region34: #{base_network_forward.1} parent=0
    _
  %s6 = ssub.s32 1, %s4
  %s7 = scalar_select 0, %s6, %s4
  $region1: #{base_network_forward.1} parent=0
    #allocation2 [shape = 'u8[4096]{0}', space=vmem, size = 0x1000, scoped, tag = 'input window, operand 0, single buffered']
    #allocation3 [shape = 's32[1]{0}', space=sflag, size = 0x4, scoped, tag = 'scoped memory for base_network_forward.1']
    #allocation4 [shape = 's32[1]{0}', space=sflag, size = 0x4, scoped, tag = 'scoped memory for base_network_forward.1']
    #allocation5 [shape = 'u8[16384]{0}', space=vmem, size = 0x4000, scoped, tag = 'input window, operand 1, single buffered']
    #allocation6 [shape = 's32[1]{0}', space=sflag, size = 0x4, scoped, tag = 'scoped memory for base_network_forward.1']
    #allocation7 [shape = 'u8[2048]{0}', space=vmem, size = 0x800, scoped, tag = 'input window, operand 2, single buffered']
    #allocation8 [shape = 'u8[4096]{0}', space=vmem, size = 0x1000, scoped, tag = 'output window, operand 0, single buffered']
    %8 = vsyncpa [#allocation3], 0
    %9 = vsyncpa [#allocation6], 0
    %10 = vsyncpa [#allocation4], 0
    // Predicated region
    $region2: #{base_network_forward.1} parent=1 // pred_check
      _
    $region3: #{base_network_forward.1} parent=1 // pred_check_branch
      %12 = sbr.rel (0) target = $region5
    $region4: #{base_network_forward.1} parent=1 // pred_region
      %s14 = ssub.s32 128, 128
      %15 = vsyncadd [#allocation3], %s14
      %s17 = sshll.u32 [#allocation2], 4
      %s18 = int_to_ptr.vmem [resolvable:$true] %s17
      %20 = dma.hbm_to_vmem [thread:$0]  %s0, 128, %s18, [#allocation3]
    $region5: #{base_network_forward.1} parent=1 // pred_fallthru
      _
    // Predicated region
    $region6: #{base_network_forward.1} parent=1 // pred_check
      _
    $region7: #{base_network_forward.1} parent=1 // pred_check_branch
      %22 = sbr.rel (0) target = $region9
    $region8: #{base_network_forward.1} parent=1 // pred_region
      %s24 = ssub.s32 512, 512
      %25 = vsyncadd [#allocation6], %s24
      %s26 = sshll.u32 [#allocation5], 4
      %s27 = int_to_ptr.vmem [resolvable:$true] %s26
      %32 = dma.hbm_to_vmem [thread:$0]  %s1, 512, %s27, [#allocation6], 128, 128, 8
    $region9: #{base_network_forward.1} parent=1 // pred_fallthru
      _
    // Predicated region
    $region10: #{base_network_forward.1} parent=1 // pred_check
      _
    $region11: #{base_network_forward.1} parent=1 // pred_check_branch
      %34 = sbr.rel (0) target = $region13
    $region12: #{base_network_forward.1} parent=1 // pred_region
      %s36 = ssub.s32 64, 64
      %37 = vsyncadd [#allocation6], %s36
      %s39 = sshll.u32 [#allocation7], 4
      %s40 = int_to_ptr.vmem [resolvable:$true] %s39
      %42 = dma.hbm_to_vmem [thread:$0]  %s2, 64, %s40, [#allocation6]
    $region13: #{base_network_forward.1} parent=1 // pred_fallthru
      _
    // Predicated region
    $region14: #{base_network_forward.1} parent=1 // pred_check
      _
    $region15: #{base_network_forward.1} parent=1 // pred_check_branch
      %44 = sbr.rel (0) target = $region17
    $region16: #{base_network_forward.1} parent=1 // pred_region
      %45 = dma.done [#allocation3], 128
    $region17: #{base_network_forward.1} parent=1 // pred_fallthru
      _
    // Predicated region
    $region18: #{base_network_forward.1} parent=1 // pred_check
      _
    $region19: #{base_network_forward.1} parent=1 // pred_check_branch
      %47 = sbr.rel (0) target = $region21
    $region20: #{base_network_forward.1} parent=1 // pred_region
      %48 = dma.done [#allocation6], 512
    $region21: #{base_network_forward.1} parent=1 // pred_fallthru
      _
    // Predicated region
    $region22: #{base_network_forward.1} parent=1 // pred_check
      _
    $region23: #{base_network_forward.1} parent=1 // pred_check_branch
      %50 = sbr.rel (0) target = $region25
    $region24: #{base_network_forward.1} parent=1 // pred_region
      %51 = dma.done [#allocation6], 64
    $region25: #{base_network_forward.1} parent=1 // pred_fallthru
      _
    %v52 = vld [vmem:[#allocation2] sm:$0xff]
    %v53 = vld [vmem:[#allocation5] sm:$0xff]
    %v54 = vld [vmem:[#allocation5 + $0x8] sm:$0xff]
    %v55 = vld [vmem:[#allocation5 + $0x10] sm:$0xff]
    %v56 = vld [vmem:[#allocation5 + $0x18] sm:$0xff]
    %v57 = vld [vmem:[#allocation7] sm:$0x1]
    %v58 = vld [vmem:[#allocation7 + $0x1] sm:$0x1]
    %v59 = vld [vmem:[#allocation7 + $0x2] sm:$0x1]
    %v60 = vlaneseq
    %v61 = vshrl.u32 %v60, 7
    %v62 = vsub.s32 0, %v61
    %v63 = vrot.slane %v57, %v62
    %vm64 = vcmask 261120
    %v66 = vsel %vm64, %v52, 0
    %68 = vmatprep.subr.mxu0 0.0
    %69 = vmatpush1.msra.mxu0 0.0
    %70 = vmatprep.subr.mxu0 0.0
    %71 = vmatpush1.msra.mxu0 0.0
    %72 = vmatprep.subr.mxu0 0.0
    %73 = vmatpush1.msra.mxu0 0.0
    %74 = vmatprep.subr.mxu0 0.0
    %75 = vmatpush1.msra.mxu0 0.0
    %76 = vmatprep.subr.mxu0 0.0
    %77 = vmatpush1.msra.mxu0 0.0
    %78 = vmatprep.subr.mxu0 0.0
    %79 = vmatpush1.msra.mxu0 0.0
    %80 = vmatprep.subr.mxu0 0.0
    %81 = vmatpush1.msra.mxu0 0.0
    %82 = vmatprep.subr.mxu0 0.0
    %83 = vmatpush1.msra.mxu0 0.0
    %84 = vmatprep.subr.mxu0 0.0
    %85 = vmatpush1.msra.mxu0 0.0
    %86 = vmatprep.subr.mxu0 0.0
    %87 = vmatpush1.msra.mxu0 0.0
    %88 = vmatprep.subr.mxu0 0.0
    %89 = vmatpush1.msra.mxu0 0.0
    %90 = vmatprep.subr.mxu0 0.0
    %91 = vmatpush1.msra.mxu0 0.0
    %92 = vmatprep.subr.mxu0 0.0
    %93 = vmatpush1.msra.mxu0 %v56
    %94 = vmatprep.subr.mxu0 0.0
    %95 = vmatpush1.msra.mxu0 %v55
    %96 = vmatprep.subr.mxu0 0.0
    %97 = vmatpush1.msra.mxu0 %v54
    %98 = vmatprep.subr.mxu0 0.0
    %99 = vmatpush1.msra.mxu0 %v53
    %100 = vmatprep.subr.mxu0 0.0
    %101 = vmatpush2.msra.mxu0 0.0
    %102 = vmatprep.subr.mxu0 0.0
    %103 = vmatpush2.msra.mxu0 0.0
    %104 = vmatprep.subr.mxu0 0.0
    %105 = vmatpush2.msra.mxu0 0.0
    %106 = vmatprep.subr.mxu0 0.0
    %107 = vmatpush2.msra.mxu0 0.0
    %108 = vmatprep.subr.mxu0 0.0
    %109 = vmatpush2.msra.mxu0 0.0
    %110 = vmatprep.subr.mxu0 0.0
    %111 = vmatpush2.msra.mxu0 0.0
    %112 = vmatprep.subr.mxu0 0.0
    %113 = vmatpush2.msra.mxu0 0.0
    %114 = vmatprep.subr.mxu0 0.0
    %115 = vmatpush2.msra.mxu0 0.0
    %116 = vmatprep.subr.mxu0 0.0
    %117 = vmatpush2.msra.mxu0 0.0
    %118 = vmatprep.subr.mxu0 0.0
    %119 = vmatpush2.msra.mxu0 0.0
    %120 = vmatprep.subr.mxu0 0.0
    %121 = vmatpush2.msra.mxu0 0.0
    %122 = vmatprep.subr.mxu0 0.0
    %123 = vmatpush2.msra.mxu0 0.0
    %124 = vmatprep.subr.mxu0 0.0
    %125 = vmatpush2.msra.mxu0 0.0
    %126 = vmatprep.subr.mxu0 0.0
    %127 = vmatpush2.msra.mxu0 0.0
    %128 = vmatprep.subr.mxu0 0.0
    %129 = vmatpush2.msra.mxu0 0.0
    %130 = vmatprep.subr.mxu0 0.0
    %131 = vmatpush2.msra.mxu0 0.0
    %132 = vmatprep.mubr.f32.mxu0 0.0
    %133 = vmatmul.mubr.f32.gmra.mxu0 %v66
    %v134 = vpop.f32.mrf.mxu0
    %v135 = vadd.f32 %v63, %v134
    %v136 = vpop.f32.mrf.mxu0
    %137 = vdwg.mxu0
    %v138 = vmax.f32 %v135, 0.0
    %v139 = vrot.slane %v138, 4
    %v140 = vadd.f32 %v138, %v139
    %v141 = vrot.slane %v140, 2
    %v142 = vadd.f32 %v140, %v141
    %v143 = vrot.slane %v142, 1
    %v144 = vadd.f32 %v142, %v143
    %v145 = vmul.f32 %v138, %v138
    %v146 = vrot.slane %v145, 4
    %v147 = vadd.f32 %v145, %v146
    %v148 = vrot.slane %v147, 2
    %v149 = vadd.f32 %v147, %v148
    %v150 = vrot.slane %v149, 1
    %v151 = vadd.f32 %v149, %v150
    %v152 = vmul.f32 %v144, 0.125
    %v153 = vmul.f32 %v151, 0.125
    %v154 = vmul.f32 %v152, %v152
    %v155 = vsub.f32 %v153, %v154
    %v156 = vmax.f32 %v155, 0.0
    %v157 = vadd.f32 %v156, 1e-05
    %v158 = vrsqrt.pop %v157
    %v159 = vmul.f32 %v158, %v58
    %v160 = vmul.f32 %v152, %v159
    %v161 = vsub.f32 %v59, %v160
    %v162 = vlaneseq
    %v163 = vshrl.u32 %v162, 7
    %v164 = vsub.s32 0, %v163
    %v165 = vrot.slane %v159, %v164
    %v166 = vmul.f32 %v138, %v165
    %v167 = vlaneseq
    %v168 = vshrl.u32 %v167, 7
    %v169 = vsub.s32 0, %v168
    %v170 = vrot.slane %v161, %v169
    %v171 = vadd.f32 %v166, %v170
    %vm172 = vcmask 523264
    %173 = vst.msk [vmem:[#allocation8] sm:$0xff] %vm172, %v171
    // Predicated region
    $region26: #{base_network_forward.1} parent=1 // pred_check
      _
    $region27: #{base_network_forward.1} parent=1 // pred_check_branch
      %175 = sbr.rel (0) target = $region29
    $region28: #{base_network_forward.1} parent=1 // pred_region
      %s177 = ssub.s32 128, 128
      %178 = vsyncadd [#allocation4], %s177
      %s180 = sshll.u32 [#allocation8], 4
      %s181 = int_to_ptr.vmem [resolvable:$true] %s180
      %183 = dma.vmem_to_hbm [thread:$0]  %s181, 128, %s3, [#allocation4]
    $region29: #{base_network_forward.1} parent=1 // pred_fallthru
      _
    // Predicated region
    $region30: #{base_network_forward.1} parent=1 // pred_check
      _
    $region31: #{base_network_forward.1} parent=1 // pred_check_branch
      %185 = sbr.rel (0) target = $region33
    $region32: #{base_network_forward.1} parent=1 // pred_region
      %186 = dma.done [#allocation4], 128
    $region33: #{base_network_forward.1} parent=1 // pred_fallthru
      _
    %187 = vsyncpa [#allocation3], 1
    %188 = vsyncpa [#allocation6], 1
    %189 = vsyncpa [#allocation4], 1

</llo_original>
